<compile_context>
chip_gen: v6e
topology: v6e:2x2x1
jax: 0.10.0
libtpu: 0.0.40
codegen_flags: <defaults>
</compile_context>

<pallas_src>
import functools
import math

import jax
import jax.numpy as jnp
from jax.experimental import pallas as pl
from jax.experimental.pallas import tpu as pltpu


def _round_up(x, m):
    return ((x + m - 1) // m) * m


# ----------------------------------------------------------------------------
# Fused MLP kernel: one grid step pushes one batch tile through ALL layers.
# refs = (w0, b0, w1, b1, ..., o_ref); weights bf16, biases f32, math in f32.
# ----------------------------------------------------------------------------
def _decoder_mlp_kernel(x_ref, *refs, n_layers):
    o_ref = refs[-1]
    h = x_ref[...].astype(jnp.float32)                   # (TM, D_in)
    for i in range(n_layers):
        w = refs[2 * i][...]                             # bf16 (Din, Dout)
        b = refs[2 * i + 1][...]                         # f32  (1, Dout)
        h = jnp.dot(h.astype(jnp.bfloat16), w,
                    preferred_element_type=jnp.float32) + b
        if i != n_layers - 1:                            # no ReLU on last layer
            h = jnp.maximum(h, 0.0)
    o_ref[...] = h.astype(o_ref.dtype)


# ----------------------------------------------------------------------------
# Decoder module (parameter construction in plain JAX, hot path in Pallas).
# ----------------------------------------------------------------------------
class DecoderPallas:
    def __init__(self, embedding_dim, decompress_dims, data_dim, key,
                 dtype=jnp.float32):
        self.dims = [embedding_dim] + list(decompress_dims) + [data_dim]
        self.data_dim = data_dim
        self.dtype = dtype
        # Kernel-internal feature widths: hidden dims padded to 128 (lane
        # dense matmuls); input/output keep their true widths so the wrapper
        # never pads or slices through HBM.
        self.kdims = ([embedding_dim]
                      + [_round_up(d, 128) for d in self.dims[1:-1]]
                      + [data_dim])

        self.params = []          # exact f32 params (for the reference)
        self.kernel_params = []   # padded; weights bf16, biases f32
        for li, (fi, fo) in enumerate(zip(self.dims[:-1], self.dims[1:])):
            key, wk, bk = jax.random.split(key, 3)
            # PyTorch Linear default init: U(-1/sqrt(fan_in), 1/sqrt(fan_in))
            bound = 1.0 / math.sqrt(fi)
            w = jax.random.uniform(wk, (fi, fo), jnp.float32, -bound, bound)
            b = jax.random.uniform(bk, (fo,), jnp.float32, -bound, bound)
            self.params.append((w, b))
            fip, fop = self.kdims[li], self.kdims[li + 1]
            # Zero padding is exact: padded rows/cols/bias are 0, ReLU(0)=0.
            w_pad = jnp.zeros((fip, fop), jnp.float32).at[:fi, :fo].set(w)
            b_pad = jnp.zeros((1, fop), jnp.float32).at[0, :fo].set(b)
            self.kernel_params.append((w_pad.astype(jnp.bfloat16), b_pad))

    # -- launch helpers -------------------------------------------------------
    def _launch(self, x, TM, grid, vmem_limit, cost, single_buffer_weights):
        M, K = x.shape
        n_layers = len(self.kernel_params)
        kernel = functools.partial(_decoder_mlp_kernel, n_layers=n_layers)

        in_specs = [pl.BlockSpec((TM, K), lambda i: (i, 0))]
        flat = []
        w_kw = ({"pipeline_mode": pl.Buffered(1)}
                if single_buffer_weights else {})
        for w, b in self.kernel_params:
            flat += [w, b]
            # Constant index_map -> DMA'd once, VMEM-resident across tiles.
            in_specs.append(pl.BlockSpec(w.shape, lambda i: (0, 0), **w_kw))
            in_specs.append(pl.BlockSpec(b.shape, lambda i: (0, 0), **w_kw))

        return pl.pallas_call(
            kernel,
            out_shape=jax.ShapeDtypeStruct((M, self.data_dim), self.dtype),
            grid=grid,
            in_specs=in_specs,
            out_specs=pl.BlockSpec((TM, self.data_dim), lambda i: (i, 0)),
            compiler_params=pltpu.CompilerParams(
                dimension_semantics=("parallel",),
                vmem_limit_bytes=int(vmem_limit)),
            cost_estimate=cost,
        )(x, *flat)

    def __call__(self, x, output_info=None):
        # `output_info` is unused, matching the original PyTorch forward.
        M, K = x.shape
        assert K == self.dims[0], (K, self.dims[0])
        data_dim = self.data_dim

        # ---- generation-aware batch tile cap, balanced across tiles --------
        try:
            vmem_cap = pltpu.get_tpu_info().vmem_capacity_bytes
        except Exception:
            vmem_cap = 128 << 20
        tm_cap = 256 if vmem_cap <= (64 << 20) else 512    # v7x: 64 MiB / TC
        n_tiles = max(1, -(-M // tm_cap))
        TM = min(_round_up(-(-M // n_tiles), 8), tm_cap)
        grid = (pl.cdiv(M, TM),)

        # ---- explicit VMEM budget -------------------------------------------
        weight_bytes = sum(w.size * w.dtype.itemsize + b.size * b.dtype.itemsize
                           for w, b in self.kernel_params)      # 1 buffer each
        out_itemsize = jnp.asarray(0, self.dtype).dtype.itemsize
        io_bytes = 2 * TM * K * 4 + 2 * TM * data_dim * out_itemsize
        inter_bytes = 4 * TM * max(self.kdims) * 4              # h staging
        vmem_limit = weight_bytes + io_bytes + inter_bytes + (4 << 20)
        vmem_limit = min(max(vmem_limit, 16 << 20), 48 << 20)
        # TODO(synk): if weight_bytes alone exceeds the ~48 MiB budget (very
        # wide decompress_dims), tile the offending layer over its output dim
        # with an extra grid axis instead of keeping every weight resident.

        cost = pl.CostEstimate(
            flops=2 * M * sum(a * b for a, b in
                              zip(self.dims[:-1], self.dims[1:])),
            transcendentals=0,
            bytes_accessed=(x.size * x.dtype.itemsize + weight_bytes
                            + M * data_dim * out_itemsize),
        )

        try:
            return self._launch(x, TM, grid, vmem_limit, cost, True)
        except Exception:
            # Fallback if Buffered(1) is rejected by this jax/Mosaic version.
            return self._launch(x, TM, grid, vmem_limit, cost, False)

    # -- pure-JAX reference matching the kernel's bf16-weight math ------------
    def reference(self, x):
        h = x.astype(jnp.float32)
        n = len(self.params)
        for idx, (w, b) in enumerate(self.params):
            h = jnp.dot(h.astype(jnp.bfloat16), w.astype(jnp.bfloat16),
                        preferred_element_type=jnp.float32) + b
            if idx != n - 1:
                h = jnp.maximum(h, 0.0)
        return h


if __name__ == "__main__":
    key = jax.random.PRNGKey(0)
    key, pkey, xkey = jax.random.split(key, 3)

    batch = 16
    embedding_dim = 32
    decompress_dims = (64, 128)
    data_dim = 48

    decoder = DecoderPallas(embedding_dim, decompress_dims, data_dim, pkey)

    x = jax.random.normal(xkey, (batch, embedding_dim), dtype=jnp.float32)

    out = jax.block_until_ready(decoder(x))
    assert out.shape == (batch, data_dim), out.shape

    ref = jax.block_until_ready(decoder.reference(x))
    err = float(jnp.max(jnp.abs(out - ref)))
    assert jnp.allclose(out, ref, rtol=2e-2, atol=2e-2), f"mismatch: {err}"

    print("KERNEL_OK")
</pallas_src>

<mosaic_0001>
module attributes {stable_mosaic.version = 11 : i64} {
  func.func @_decoder_mlp_kernel(%arg0: i32, %arg1: memref<16x32xf32, #tpu.memory_space<vmem>>, %arg2: memref<32x128xbf16, #tpu.memory_space<vmem>>, %arg3: memref<1x128xf32, #tpu.memory_space<vmem>>, %arg4: memref<128x128xbf16, #tpu.memory_space<vmem>>, %arg5: memref<1x128xf32, #tpu.memory_space<vmem>>, %arg6: memref<128x48xbf16, #tpu.memory_space<vmem>>, %arg7: memref<1x48xf32, #tpu.memory_space<vmem>>, %arg8: memref<16x48xf32, #tpu.memory_space<vmem>>) attributes {dimension_semantics = [#tpu.dimension_semantics<parallel>], iteration_bounds = array<i64: 1>, scalar_prefetch = 0 : i64, scratch_operands = 0 : i64, tpu.core_type = #tpu.core_type<tc>, window_params = [{transform_indices = @transform_0, window_bounds = array<i64: 16, 32>}, {pipeline_mode = #tpu.pipeline_mode<synchronous>, transform_indices = @transform_1, window_bounds = array<i64: 32, 128>}, {pipeline_mode = #tpu.pipeline_mode<synchronous>, transform_indices = @transform_2, window_bounds = array<i64: 1, 128>}, {pipeline_mode = #tpu.pipeline_mode<synchronous>, transform_indices = @transform_3, window_bounds = array<i64: 128, 128>}, {pipeline_mode = #tpu.pipeline_mode<synchronous>, transform_indices = @transform_4, window_bounds = array<i64: 1, 128>}, {pipeline_mode = #tpu.pipeline_mode<synchronous>, transform_indices = @transform_5, window_bounds = array<i64: 128, 48>}, {pipeline_mode = #tpu.pipeline_mode<synchronous>, transform_indices = @transform_6, window_bounds = array<i64: 1, 48>}, {transform_indices = @transform_7, window_bounds = array<i64: 16, 48>}]} {
    %c0 = arith.constant 0 : index
    %c0_0 = arith.constant 0 : index
    %0 = vector.load %arg1[%c0, %c0_0] : memref<16x32xf32, #tpu.memory_space<vmem>>, vector<16x32xf32>
    %c0_1 = arith.constant 0 : index
    %c0_2 = arith.constant 0 : index
    %1 = vector.load %arg2[%c0_1, %c0_2] : memref<32x128xbf16, #tpu.memory_space<vmem>>, vector<32x128xbf16>
    %c0_3 = arith.constant 0 : index
    %c0_4 = arith.constant 0 : index
    %2 = vector.load %arg3[%c0_3, %c0_4] : memref<1x128xf32, #tpu.memory_space<vmem>>, vector<1x128xf32>
    %3 = arith.truncf %0 : vector<16x32xf32> to vector<16x32xbf16>
    %cst = arith.constant dense<0.000000e+00> : vector<16x128xf32>
    %4 = tpu.matmul %3, %1, %cst {dimension_numbers = #tpu.dot_dimension_numbers<[1], [0], [0], [1], [0, 0, 1, 1], [], []>} : vector<16x32xbf16>, vector<32x128xbf16>, vector<16x128xf32> -> vector<16x128xf32>
    %5 = vector.broadcast %2 : vector<1x128xf32> to vector<16x128xf32>
    %6 = arith.addf %4, %5 : vector<16x128xf32>
    %cst_5 = arith.constant 0.000000e+00 : f32
    %7 = vector.broadcast %cst_5 : f32 to vector<16x128xf32>
    %8 = arith.maximumf %6, %7 : vector<16x128xf32>
    %c0_6 = arith.constant 0 : index
    %c0_7 = arith.constant 0 : index
    %9 = vector.load %arg4[%c0_6, %c0_7] : memref<128x128xbf16, #tpu.memory_space<vmem>>, vector<128x128xbf16>
    %c0_8 = arith.constant 0 : index
    %c0_9 = arith.constant 0 : index
    %10 = vector.load %arg5[%c0_8, %c0_9] : memref<1x128xf32, #tpu.memory_space<vmem>>, vector<1x128xf32>
    %11 = arith.truncf %8 : vector<16x128xf32> to vector<16x128xbf16>
    %cst_10 = arith.constant dense<0.000000e+00> : vector<16x128xf32>
    %12 = tpu.matmul %11, %9, %cst_10 {dimension_numbers = #tpu.dot_dimension_numbers<[1], [0], [0], [1], [0, 0, 1, 1], [], []>} : vector<16x128xbf16>, vector<128x128xbf16>, vector<16x128xf32> -> vector<16x128xf32>
    %13 = vector.broadcast %10 : vector<1x128xf32> to vector<16x128xf32>
    %14 = arith.addf %12, %13 : vector<16x128xf32>
    %cst_11 = arith.constant 0.000000e+00 : f32
    %15 = vector.broadcast %cst_11 : f32 to vector<16x128xf32>
    %16 = arith.maximumf %14, %15 : vector<16x128xf32>
    %c0_12 = arith.constant 0 : index
    %c0_13 = arith.constant 0 : index
    %17 = vector.load %arg6[%c0_12, %c0_13] : memref<128x48xbf16, #tpu.memory_space<vmem>>, vector<128x48xbf16>
    %c0_14 = arith.constant 0 : index
    %c0_15 = arith.constant 0 : index
    %18 = vector.load %arg7[%c0_14, %c0_15] : memref<1x48xf32, #tpu.memory_space<vmem>>, vector<1x48xf32>
    %19 = arith.truncf %16 : vector<16x128xf32> to vector<16x128xbf16>
    %cst_16 = arith.constant dense<0.000000e+00> : vector<16x48xf32>
    %20 = tpu.matmul %19, %17, %cst_16 {dimension_numbers = #tpu.dot_dimension_numbers<[1], [0], [0], [1], [0, 0, 1, 1], [], []>} : vector<16x128xbf16>, vector<128x48xbf16>, vector<16x48xf32> -> vector<16x48xf32>
    %21 = vector.broadcast %18 : vector<1x48xf32> to vector<16x48xf32>
    %22 = arith.addf %20, %21 : vector<16x48xf32>
    %c0_17 = arith.constant 0 : index
    %c0_18 = arith.constant 0 : index
    %23 = vector.load %arg8[%c0_17, %c0_18] : memref<16x48xf32, #tpu.memory_space<vmem>>, vector<16x48xf32>
    tpu.vector_store %arg8[%c0_17, %c0_18], %22 {strides = array<i32>} : memref<16x48xf32, #tpu.memory_space<vmem>>, vector<16x48xf32>,
    return
  }
  func.func @transform_0(%arg0: i32) -> (i32, i32) {
    %c0_i32 = arith.constant 0 : i32
    %c0_i32_0 = arith.constant 0 : i32
    return %arg0, %c0_i32 : i32, i32
  }
  func.func @transform_1(%arg0: i32) -> (i32, i32) {
    %c0_i32 = arith.constant 0 : i32
    %c0_i32_0 = arith.constant 0 : i32
    %c0_i32_1 = arith.constant 0 : i32
    return %c0_i32, %c0_i32_0 : i32, i32
  }
  func.func @transform_2(%arg0: i32) -> (i32, i32) {
    %c0_i32 = arith.constant 0 : i32
    %c0_i32_0 = arith.constant 0 : i32
    %c0_i32_1 = arith.constant 0 : i32
    return %c0_i32, %c0_i32_0 : i32, i32
  }
  func.func @transform_3(%arg0: i32) -> (i32, i32) {
    %c0_i32 = arith.constant 0 : i32
    %c0_i32_0 = arith.constant 0 : i32
    %c0_i32_1 = arith.constant 0 : i32
    return %c0_i32, %c0_i32_0 : i32, i32
  }
  func.func @transform_4(%arg0: i32) -> (i32, i32) {
    %c0_i32 = arith.constant 0 : i32
    %c0_i32_0 = arith.constant 0 : i32
    %c0_i32_1 = arith.constant 0 : i32
    return %c0_i32, %c0_i32_0 : i32, i32
  }
  func.func @transform_5(%arg0: i32) -> (i32, i32) {
    %c0_i32 = arith.constant 0 : i32
    %c0_i32_0 = arith.constant 0 : i32
    %c0_i32_1 = arith.constant 0 : i32
    return %c0_i32, %c0_i32_0 : i32, i32
  }
  func.func @transform_6(%arg0: i32) -> (i32, i32) {
    %c0_i32 = arith.constant 0 : i32
    %c0_i32_0 = arith.constant 0 : i32
    %c0_i32_1 = arith.constant 0 : i32
    return %c0_i32, %c0_i32_0 : i32, i32
  }
  func.func @transform_7(%arg0: i32) -> (i32, i32) {
    %c0_i32 = arith.constant 0 : i32
    %c0_i32_0 = arith.constant 0 : i32
    return %arg0, %c0_i32 : i32, i32
  }
}

module attributes {stable_mosaic.version = 11 : i64} {
  func.func @_decoder_mlp_kernel(%arg0: i32, %arg1: memref<16x32xf32, #tpu.memory_space<vmem>>, %arg2: memref<32x128xbf16, #tpu.memory_space<vmem>>, %arg3: memref<1x128xf32, #tpu.memory_space<vmem>>, %arg4: memref<128x128xbf16, #tpu.memory_space<vmem>>, %arg5: memref<1x128xf32, #tpu.memory_space<vmem>>, %arg6: memref<128x48xbf16, #tpu.memory_space<vmem>>, %arg7: memref<1x48xf32, #tpu.memory_space<vmem>>, %arg8: memref<16x48xf32, #tpu.memory_space<vmem>>) attributes {dimension_semantics = [#tpu.dimension_semantics<parallel>], iteration_bounds = array<i64: 1>, scalar_prefetch = 0 : i64, scratch_operands = 0 : i64, tpu.core_type = #tpu.core_type<tc>, window_params = [{transform_indices = @transform_0, window_bounds = array<i64: 16, 32>}, {pipeline_mode = #tpu.pipeline_mode<synchronous>, transform_indices = @transform_1, window_bounds = array<i64: 32, 128>}, {pipeline_mode = #tpu.pipeline_mode<synchronous>, transform_indices = @transform_2, window_bounds = array<i64: 1, 128>}, {pipeline_mode = #tpu.pipeline_mode<synchronous>, transform_indices = @transform_3, window_bounds = array<i64: 128, 128>}, {pipeline_mode = #tpu.pipeline_mode<synchronous>, transform_indices = @transform_4, window_bounds = array<i64: 1, 128>}, {pipeline_mode = #tpu.pipeline_mode<synchronous>, transform_indices = @transform_5, window_bounds = array<i64: 128, 48>}, {pipeline_mode = #tpu.pipeline_mode<synchronous>, transform_indices = @transform_6, window_bounds = array<i64: 1, 48>}, {transform_indices = @transform_7, window_bounds = array<i64: 16, 48>}]} {
    %c0 = arith.constant 0 : index
    %c0_0 = arith.constant 0 : index
    %0 = vector.load %arg1[%c0, %c0_0] : memref<16x32xf32, #tpu.memory_space<vmem>>, vector<16x32xf32>
    %c0_1 = arith.constant 0 : index
    %c0_2 = arith.constant 0 : index
    %1 = vector.load %arg2[%c0_1, %c0_2] : memref<32x128xbf16, #tpu.memory_space<vmem>>, vector<32x128xbf16>
    %c0_3 = arith.constant 0 : index
    %c0_4 = arith.constant 0 : index
    %2 = vector.load %arg3[%c0_3, %c0_4] : memref<1x128xf32, #tpu.memory_space<vmem>>, vector<1x128xf32>
    %3 = arith.truncf %0 : vector<16x32xf32> to vector<16x32xbf16>
    %cst = arith.constant dense<0.000000e+00> : vector<16x128xf32>
    %4 = tpu.matmul %3, %1, %cst {dimension_numbers = #tpu.dot_dimension_numbers<[1], [0], [0], [1], [0, 0, 1, 1], [], []>} : vector<16x32xbf16>, vector<32x128xbf16>, vector<16x128xf32> -> vector<16x128xf32>
    %5 = vector.broadcast %2 : vector<1x128xf32> to vector<16x128xf32>
    %6 = arith.addf %4, %5 : vector<16x128xf32>
    %cst_5 = arith.constant 0.000000e+00 : f32
    %7 = vector.broadcast %cst_5 : f32 to vector<16x128xf32>
    %8 = arith.maximumf %6, %7 : vector<16x128xf32>
    %c0_6 = arith.constant 0 : index
    %c0_7 = arith.constant 0 : index
    %9 = vector.load %arg4[%c0_6, %c0_7] : memref<128x128xbf16, #tpu.memory_space<vmem>>, vector<128x128xbf16>
    %c0_8 = arith.constant 0 : index
    %c0_9 = arith.constant 0 : index
    %10 = vector.load %arg5[%c0_8, %c0_9] : memref<1x128xf32, #tpu.memory_space<vmem>>, vector<1x128xf32>
    %11 = arith.truncf %8 : vector<16x128xf32> to vector<16x128xbf16>
    %cst_10 = arith.constant dense<0.000000e+00> : vector<16x128xf32>
    %12 = tpu.matmul %11, %9, %cst_10 {dimension_numbers = #tpu.dot_dimension_numbers<[1], [0], [0], [1], [0, 0, 1, 1], [], []>} : vector<16x128xbf16>, vector<128x128xbf16>, vector<16x128xf32> -> vector<16x128xf32>
    %13 = vector.broadcast %10 : vector<1x128xf32> to vector<16x128xf32>
    %14 = arith.addf %12, %13 : vector<16x128xf32>
    %cst_11 = arith.constant 0.000000e+00 : f32
    %15 = vector.broadcast %cst_11 : f32 to vector<16x128xf32>
    %16 = arith.maximumf %14, %15 : vector<16x128xf32>
    %c0_12 = arith.constant 0 : index
    %c0_13 = arith.constant 0 : index
    %17 = vector.load %arg6[%c0_12, %c0_13] : memref<128x48xbf16, #tpu.memory_space<vmem>>, vector<128x48xbf16>
    %c0_14 = arith.constant 0 : index
    %c0_15 = arith.constant 0 : index
    %18 = vector.load %arg7[%c0_14, %c0_15] : memref<1x48xf32, #tpu.memory_space<vmem>>, vector<1x48xf32>
    %19 = arith.truncf %16 : vector<16x128xf32> to vector<16x128xbf16>
    %cst_16 = arith.constant dense<0.000000e+00> : vector<16x48xf32>
    %20 = tpu.matmul %19, %17, %cst_16 {dimension_numbers = #tpu.dot_dimension_numbers<[1], [0], [0], [1], [0, 0, 1, 1], [], []>} : vector<16x128xbf16>, vector<128x48xbf16>, vector<16x48xf32> -> vector<16x48xf32>
    %21 = vector.broadcast %18 : vector<1x48xf32> to vector<16x48xf32>
    %22 = arith.addf %20, %21 : vector<16x48xf32>
    %c0_17 = arith.constant 0 : index
    %c0_18 = arith.constant 0 : index
    %23 = vector.load %arg8[%c0_17, %c0_18] : memref<16x48xf32, #tpu.memory_space<vmem>>, vector<16x48xf32>
    tpu.vector_store %arg8[%c0_17, %c0_18], %22 {strides = array<i32>} : memref<16x48xf32, #tpu.memory_space<vmem>>, vector<16x48xf32>,
    return
  }
  func.func @transform_0(%arg0: i32) -> (i32, i32) {
    %c0_i32 = arith.constant 0 : i32
    %c0_i32_0 = arith.constant 0 : i32
    return %arg0, %c0_i32 : i32, i32
  }
  func.func @transform_1(%arg0: i32) -> (i32, i32) {
    %c0_i32 = arith.constant 0 : i32
    %c0_i32_0 = arith.constant 0 : i32
    %c0_i32_1 = arith.constant 0 : i32
    return %c0_i32, %c0_i32_0 : i32, i32
  }
  func.func @transform_2(%arg0: i32) -> (i32, i32) {
    %c0_i32 = arith.constant 0 : i32
    %c0_i32_0 = arith.constant 0 : i32
    %c0_i32_1 = arith.constant 0 : i32
    return %c0_i32, %c0_i32_0 : i32, i32
  }
  func.func @transform_3(%arg0: i32) -> (i32, i32) {
    %c0_i32 = arith.constant 0 : i32
    %c0_i32_0 = arith.constant 0 : i32
    %c0_i32_1 = arith.constant 0 : i32
    return %c0_i32, %c0_i32_0 : i32, i32
  }
  func.func @transform_4(%arg0: i32) -> (i32, i32) {
    %c0_i32 = arith.constant 0 : i32
    %c0_i32_0 = arith.constant 0 : i32
    %c0_i32_1 = arith.constant 0 : i32
    return %c0_i32, %c0_i32_0 : i32, i32
  }
  func.func @transform_5(%arg0: i32) -> (i32, i32) {
    %c0_i32 = arith.constant 0 : i32
    %c0_i32_0 = arith.constant 0 : i32
    %c0_i32_1 = arith.constant 0 : i32
    return %c0_i32, %c0_i32_0 : i32, i32
  }
  func.func @transform_6(%arg0: i32) -> (i32, i32) {
    %c0_i32 = arith.constant 0 : i32
    %c0_i32_0 = arith.constant 0 : i32
    %c0_i32_1 = arith.constant 0 : i32
    return %c0_i32, %c0_i32_0 : i32, i32
  }
  func.func @transform_7(%arg0: i32) -> (i32, i32) {
    %c0_i32 = arith.constant 0 : i32
    %c0_i32_0 = arith.constant 0 : i32
    return %arg0, %c0_i32 : i32, i32
  }
}

</mosaic_0001>

<llo_original>
// kernel: tpu_custom_call.1
$region0: #{tpu_custom_call.1}
  #allocation0 [shape = 'u32[]', space=smem, size = 0x4, offset = 0x4, fixed_abs, tag = 'smem constant byte address 0x4 - core index']
  #allocation1 [shape = 'u32[144,128]{1,0:T(1,128)}', space=vmem, size = 0x12000, scoped, tag = 'internal scratch']
  %s0 = inlined_call_operand.vmem [shape: f32[16,32], index: 0, kind: input, shape index: {}]
  %s1 = inlined_call_operand.hbm [shape: bf16[32,128], index: 1, kind: input, shape index: {}]
  %s2 = inlined_call_operand.vmem [shape: f32[1,128], index: 2, kind: input, shape index: {}]
  %s3 = inlined_call_operand.vmem [shape: bf16[128,128], index: 3, kind: input, shape index: {}]
  %s4 = inlined_call_operand.vmem [shape: f32[1,128], index: 4, kind: input, shape index: {}]
  %s5 = inlined_call_operand.vmem [shape: bf16[128,48], index: 5, kind: input, shape index: {}]
  %s6 = inlined_call_operand.vmem [shape: f32[1,48], index: 6, kind: input, shape index: {}]
  %s7 = inlined_call_operand.hbm [shape: f32[16,48], index: 7, kind: output, shape index: {}]
  %s8 = sld [smem:[#allocation0]]
  $region42: #{tpu_custom_call.1} parent=0
    _
  %s10 = ssub.s32 1, %s8
  %s11 = scalar_select 0, %s10, %s8
  $region1: #{tpu_custom_call.1} parent=0
    #allocation2 [shape = 'u8[8192]{0}', space=vmem, size = 0x2000, scoped, tag = 'input window, operand 1, single buffered']
    #allocation3 [shape = 's32[1]{0}', space=sflag, size = 0x4, scoped, tag = 'scoped memory for tpu_custom_call.1']
    #allocation4 [shape = 's32[1]{0}', space=sflag, size = 0x4, scoped, tag = 'scoped memory for tpu_custom_call.1']
    #allocation5 [shape = 'u8[8192]{0}', space=vmem, size = 0x2000, scoped, tag = 'output window, operand 0, single buffered']
    %12 = vsyncpa [#allocation3], 0
    %13 = vsyncpa [#allocation4], 0
    // Predicated region
    $region2: #{tpu_custom_call.1} parent=1 // pred_check
      _
    $region3: #{tpu_custom_call.1} parent=1 // pred_check_branch
      %15 = sbr.rel (0) target = $region5
    $region4: #{tpu_custom_call.1} parent=1 // pred_region
      _
    $region5: #{tpu_custom_call.1} parent=1 // pred_fallthru
      _
    // Predicated region
    $region6: #{tpu_custom_call.1} parent=1 // pred_check
      _
    $region7: #{tpu_custom_call.1} parent=1 // pred_check_branch
      %17 = sbr.rel (0) target = $region9
    $region8: #{tpu_custom_call.1} parent=1 // pred_region
      %s19 = ssub.s32 256, 256
      %20 = vsyncadd [#allocation3], %s19
      %s21 = sshll.u32 [#allocation2], 4
      %s22 = int_to_ptr.vmem [resolvable:$true] %s21
      %27 = dma.hbm_to_vmem [thread:$0]  %s1, 256, %s22, [#allocation3], 64, 64, 4
    $region9: #{tpu_custom_call.1} parent=1 // pred_fallthru
      _
    // Predicated region
    $region10: #{tpu_custom_call.1} parent=1 // pred_check
      _
    $region11: #{tpu_custom_call.1} parent=1 // pred_check_branch
      %29 = sbr.rel (0) target = $region13
    $region12: #{tpu_custom_call.1} parent=1 // pred_region
      _
    $region13: #{tpu_custom_call.1} parent=1 // pred_fallthru
      _
    // Predicated region
    $region14: #{tpu_custom_call.1} parent=1 // pred_check
      _
    $region15: #{tpu_custom_call.1} parent=1 // pred_check_branch
      %31 = sbr.rel (0) target = $region17
    $region16: #{tpu_custom_call.1} parent=1 // pred_region
      _
    $region17: #{tpu_custom_call.1} parent=1 // pred_fallthru
      _
    // Predicated region
    $region18: #{tpu_custom_call.1} parent=1 // pred_check
      _
    $region19: #{tpu_custom_call.1} parent=1 // pred_check_branch
      %33 = sbr.rel (0) target = $region21
    $region20: #{tpu_custom_call.1} parent=1 // pred_region
      _
    $region21: #{tpu_custom_call.1} parent=1 // pred_fallthru
      _
    // Predicated region
    $region22: #{tpu_custom_call.1} parent=1 // pred_check
      _
    $region23: #{tpu_custom_call.1} parent=1 // pred_check_branch
      %35 = sbr.rel (0) target = $region25
    $region24: #{tpu_custom_call.1} parent=1 // pred_region
      _
    $region25: #{tpu_custom_call.1} parent=1 // pred_fallthru
      _
    // Predicated region
    $region26: #{tpu_custom_call.1} parent=1 // pred_check
      _
    $region27: #{tpu_custom_call.1} parent=1 // pred_check_branch
      %37 = sbr.rel (0) target = $region29
    $region28: #{tpu_custom_call.1} parent=1 // pred_region
      _
    $region29: #{tpu_custom_call.1} parent=1 // pred_fallthru
      _
    // Predicated region
    $region30: #{tpu_custom_call.1} parent=1 // pred_check
      _
    $region31: #{tpu_custom_call.1} parent=1 // pred_check_branch
      %39 = sbr.rel (0) target = $region33
    $region32: #{tpu_custom_call.1} parent=1 // pred_region
      %40 = dma.done [#allocation3], 256
    $region33: #{tpu_custom_call.1} parent=1 // pred_fallthru
      _
    %v42 = vld [vmem:[%s0] sm:$0xff]
    %v43 = vld [vmem:[%s0 + $0x8] sm:$0xff]
    %v44 = vld [vmem:[#allocation2] sm:$0xf]
    %v45 = vld [vmem:[#allocation2 + $0x4] sm:$0xf]
    %v46 = vld [vmem:[#allocation2 + $0x8] sm:$0xf]
    %v47 = vld [vmem:[#allocation2 + $0xc] sm:$0xf]
    %v48 = vld [vmem:[%s2] sm:$0x1]
    %v49 = vpack.c.bf16 %v43, %v42
    %v51 = vlaneseq
    %v52 = vshrl.u32 %v51, 7
    %v53 = vsub.s32 0, %v52
    %v54 = vrot.slane %v48, %v53
    %v60 = vunpack.c.l.b16 %v44
    %v61 = vunpack.c.l.b16 %v45
    %v62 = vunpack.c.l.b16 %v46
    %v63 = vunpack.c.l.b16 %v47
    %v64 = vpack.c.b16 %v61, %v60
    %v65 = vpack.c.b16 %v63, %v62
    %vm68 = vcmask 261120
    %v70 = vsel %vm68, %v49, 0
    %72 = vmatprep.subr.bf16.mxu0 0
    %73 = vmatpush1.bf16.msra.mxu0 0
    %74 = vmatprep.subr.bf16.mxu0 0
    %75 = vmatpush1.bf16.msra.mxu0 0
    %76 = vmatprep.subr.bf16.mxu0 0
    %77 = vmatpush1.bf16.msra.mxu0 0
    %78 = vmatprep.subr.bf16.mxu0 0
    %79 = vmatpush1.bf16.msra.mxu0 0
    %80 = vmatprep.subr.bf16.mxu0 0
    %81 = vmatpush1.bf16.msra.mxu0 0
    %82 = vmatprep.subr.bf16.mxu0 0
    %83 = vmatpush1.bf16.msra.mxu0 0
    %84 = vmatprep.subr.bf16.mxu0 0
    %85 = vmatpush1.bf16.msra.mxu0 %v65
    %86 = vmatprep.subr.bf16.mxu0 0
    %87 = vmatpush1.bf16.msra.mxu0 %v64
    %88 = vmatprep.subr.bf16.mxu0 0
    %89 = vmatpush2.bf16.msra.mxu0 0
    %90 = vmatprep.subr.bf16.mxu0 0
    %91 = vmatpush2.bf16.msra.mxu0 0
    %92 = vmatprep.subr.bf16.mxu0 0
    %93 = vmatpush2.bf16.msra.mxu0 0
    %94 = vmatprep.subr.bf16.mxu0 0
    %95 = vmatpush2.bf16.msra.mxu0 0
    %96 = vmatprep.subr.bf16.mxu0 0
    %97 = vmatpush2.bf16.msra.mxu0 0
    %98 = vmatprep.subr.bf16.mxu0 0
    %99 = vmatpush2.bf16.msra.mxu0 0
    %100 = vmatprep.subr.bf16.mxu0 0
    %101 = vmatpush2.bf16.msra.mxu0 0
    %102 = vmatprep.subr.bf16.mxu0 0
    %103 = vmatpush2.bf16.msra.mxu0 0
    %104 = vmatprep.mubr.bf16.mxu0 0
    %105 = vmatmul.mubr.bf16.gmra.mxu0 %v70
    %v106 = vpop.f32.mrf.mxu0
    %v107 = vadd.f32 %v54, %v106
    %v108 = vpop.f32.mrf.mxu0
    %v109 = vpop.f32.mrf.mxu0
    %v110 = vadd.f32 %v54, %v109
    %v111 = vpop.f32.mrf.mxu0
    %112 = vdwg.mxu0
    %v113 = vmax.f32 %v107, 0.0
    %v114 = vmax.f32 %v110, 0.0
    %v115 = vld [vmem:[%s3] sm:$0xf]
    %v116 = vld [vmem:[%s3 + $0x4] sm:$0xf]
    %v117 = vld [vmem:[%s3 + $0x8] sm:$0xf]
    %v118 = vld [vmem:[%s3 + $0xc] sm:$0xf]
    %v119 = vld [vmem:[%s3 + $0x10] sm:$0xf]
    %v120 = vld [vmem:[%s3 + $0x14] sm:$0xf]
    %v121 = vld [vmem:[%s3 + $0x18] sm:$0xf]
    %v122 = vld [vmem:[%s3 + $0x1c] sm:$0xf]
    %v123 = vld [vmem:[%s3 + $0x20] sm:$0xf]
    %v124 = vld [vmem:[%s3 + $0x24] sm:$0xf]
    %v125 = vld [vmem:[%s3 + $0x28] sm:$0xf]
    %v126 = vld [vmem:[%s3 + $0x2c] sm:$0xf]
    %v127 = vld [vmem:[%s3 + $0x30] sm:$0xf]
    %v128 = vld [vmem:[%s3 + $0x34] sm:$0xf]
    %v129 = vld [vmem:[%s3 + $0x38] sm:$0xf]
    %v130 = vld [vmem:[%s3 + $0x3c] sm:$0xf]
    %v131 = vld [vmem:[%s4] sm:$0x1]
    %v132 = vpack.c.bf16 %v114, %v113
    %v134 = vlaneseq
    %v135 = vshrl.u32 %v134, 7
    %v136 = vsub.s32 0, %v135
    %v137 = vrot.slane %v131, %v136
    %v155 = vunpack.c.l.b16 %v115
    %v156 = vunpack.c.l.b16 %v116
    %v157 = vunpack.c.l.b16 %v117
    %v158 = vunpack.c.l.b16 %v118
    %v159 = vunpack.c.l.b16 %v119
    %v160 = vunpack.c.l.b16 %v120
    %v161 = vunpack.c.l.b16 %v121
    %v162 = vunpack.c.l.b16 %v122
    %v163 = vunpack.c.l.b16 %v123
    %v164 = vunpack.c.l.b16 %v124
    %v165 = vunpack.c.l.b16 %v125
    %v166 = vunpack.c.l.b16 %v126
    %v167 = vunpack.c.l.b16 %v127
    %v168 = vunpack.c.l.b16 %v128
    %v169 = vunpack.c.l.b16 %v129
    %v170 = vunpack.c.l.b16 %v130
    %v171 = vpack.c.b16 %v156, %v155
    %v172 = vpack.c.b16 %v158, %v157
    %v173 = vpack.c.b16 %v160, %v159
    %v174 = vpack.c.b16 %v162, %v161
    %v175 = vpack.c.b16 %v164, %v163
    %v176 = vpack.c.b16 %v166, %v165
    %v177 = vpack.c.b16 %v168, %v167
    %v178 = vpack.c.b16 %v170, %v169
    %187 = vmatprep.subr.bf16.mxu0 0
    %188 = vmatpush1.bf16.msra.mxu0 %v178
    %189 = vmatprep.subr.bf16.mxu0 0
    %190 = vmatpush1.bf16.msra.mxu0 %v177
    %191 = vmatprep.subr.bf16.mxu0 0
    %192 = vmatpush1.bf16.msra.mxu0 %v176
    %193 = vmatprep.subr.bf16.mxu0 0
    %194 = vmatpush1.bf16.msra.mxu0 %v175
    %195 = vmatprep.subr.bf16.mxu0 0
    %196 = vmatpush1.bf16.msra.mxu0 %v174
    %197 = vmatprep.subr.bf16.mxu0 0
    %198 = vmatpush1.bf16.msra.mxu0 %v173
    %199 = vmatprep.subr.bf16.mxu0 0
    %200 = vmatpush1.bf16.msra.mxu0 %v172
    %201 = vmatprep.subr.bf16.mxu0 0
    %202 = vmatpush1.bf16.msra.mxu0 %v171
    %203 = vmatprep.subr.bf16.mxu0 0
    %204 = vmatpush2.bf16.msra.mxu0 0
    %205 = vmatprep.subr.bf16.mxu0 0
    %206 = vmatpush2.bf16.msra.mxu0 0
    %207 = vmatprep.subr.bf16.mxu0 0
    %208 = vmatpush2.bf16.msra.mxu0 0
    %209 = vmatprep.subr.bf16.mxu0 0
    %210 = vmatpush2.bf16.msra.mxu0 0
    %211 = vmatprep.subr.bf16.mxu0 0
    %212 = vmatpush2.bf16.msra.mxu0 0
    %213 = vmatprep.subr.bf16.mxu0 0
    %214 = vmatpush2.bf16.msra.mxu0 0
    %215 = vmatprep.subr.bf16.mxu0 0
    %216 = vmatpush2.bf16.msra.mxu0 0
    %217 = vmatprep.subr.bf16.mxu0 0
    %218 = vmatpush2.bf16.msra.mxu0 0
    %219 = vmatprep.mubr.bf16.mxu0 0
    %220 = vmatmul.mubr.bf16.gmra.mxu0 %v132
    %v221 = vpop.f32.mrf.mxu0
    %v222 = vadd.f32 %v137, %v221
    %v223 = vpop.f32.mrf.mxu0
    %v224 = vpop.f32.mrf.mxu0
    %v225 = vadd.f32 %v137, %v224
    %v226 = vpop.f32.mrf.mxu0
    %227 = vdwg.mxu0
    %v228 = vmax.f32 %v222, 0.0
    %v229 = vmax.f32 %v225, 0.0
    %v230 = vld [vmem:[%s5] sm:$0xf]
    %v231 = vld [vmem:[%s5 + $0x4] sm:$0xf]
    %v232 = vld [vmem:[%s5 + $0x8] sm:$0xf]
    %v233 = vld [vmem:[%s5 + $0xc] sm:$0xf]
    %v234 = vld [vmem:[%s5 + $0x10] sm:$0xf]
    %v235 = vld [vmem:[%s5 + $0x14] sm:$0xf]
    %v236 = vld [vmem:[%s5 + $0x18] sm:$0xf]
    %v237 = vld [vmem:[%s5 + $0x1c] sm:$0xf]
    %v238 = vld [vmem:[%s5 + $0x20] sm:$0xf]
    %v239 = vld [vmem:[%s5 + $0x24] sm:$0xf]
    %v240 = vld [vmem:[%s5 + $0x28] sm:$0xf]
    %v241 = vld [vmem:[%s5 + $0x2c] sm:$0xf]
    %v242 = vld [vmem:[%s5 + $0x30] sm:$0xf]
    %v243 = vld [vmem:[%s5 + $0x34] sm:$0xf]
    %v244 = vld [vmem:[%s5 + $0x38] sm:$0xf]
    %v245 = vld [vmem:[%s5 + $0x3c] sm:$0xf]
    %v246 = vld [vmem:[%s6] sm:$0x1]
    %v247 = vpack.c.bf16 %v229, %v228
    %v249 = vlaneseq
    %v250 = vshrl.u32 %v249, 7
    %v251 = vsub.s32 0, %v250
    %v252 = vrot.slane %v246, %v251
    %v270 = vunpack.c.l.b16 %v230
    %v271 = vunpack.c.l.b16 %v231
    %v272 = vunpack.c.l.b16 %v232
    %v273 = vunpack.c.l.b16 %v233
    %v274 = vunpack.c.l.b16 %v234
    %v275 = vunpack.c.l.b16 %v235
    %v276 = vunpack.c.l.b16 %v236
    %v277 = vunpack.c.l.b16 %v237
    %v278 = vunpack.c.l.b16 %v238
    %v279 = vunpack.c.l.b16 %v239
    %v280 = vunpack.c.l.b16 %v240
    %v281 = vunpack.c.l.b16 %v241
    %v282 = vunpack.c.l.b16 %v242
    %v283 = vunpack.c.l.b16 %v243
    %v284 = vunpack.c.l.b16 %v244
    %v285 = vunpack.c.l.b16 %v245
    %v286 = vpack.c.b16 %v271, %v270
    %v287 = vpack.c.b16 %v273, %v272
    %v288 = vpack.c.b16 %v275, %v274
    %v289 = vpack.c.b16 %v277, %v276
    %v290 = vpack.c.b16 %v279, %v278
    %v291 = vpack.c.b16 %v281, %v280
    %v292 = vpack.c.b16 %v283, %v282
    %v293 = vpack.c.b16 %v285, %v284
    %302 = vmatprep.subr.bf16.mxu0 0
    %303 = vmatpush1.bf16.msra.mxu0 %v293
    %304 = vmatprep.subr.bf16.mxu0 0
    %305 = vmatpush1.bf16.msra.mxu0 %v292
    %306 = vmatprep.subr.bf16.mxu0 0
    %307 = vmatpush1.bf16.msra.mxu0 %v291
    %308 = vmatprep.subr.bf16.mxu0 0
    %309 = vmatpush1.bf16.msra.mxu0 %v290
    %310 = vmatprep.subr.bf16.mxu0 0
    %311 = vmatpush1.bf16.msra.mxu0 %v289
    %312 = vmatprep.subr.bf16.mxu0 0
    %313 = vmatpush1.bf16.msra.mxu0 %v288
    %314 = vmatprep.subr.bf16.mxu0 0
    %315 = vmatpush1.bf16.msra.mxu0 %v287
    %316 = vmatprep.subr.bf16.mxu0 0
    %317 = vmatpush1.bf16.msra.mxu0 %v286
    %318 = vmatprep.subr.bf16.mxu0 0
    %319 = vmatpush2.bf16.msra.mxu0 0
    %320 = vmatprep.subr.bf16.mxu0 0
    %321 = vmatpush2.bf16.msra.mxu0 0
    %322 = vmatprep.subr.bf16.mxu0 0
    %323 = vmatpush2.bf16.msra.mxu0 0
    %324 = vmatprep.subr.bf16.mxu0 0
    %325 = vmatpush2.bf16.msra.mxu0 0
    %326 = vmatprep.subr.bf16.mxu0 0
    %327 = vmatpush2.bf16.msra.mxu0 0
    %328 = vmatprep.subr.bf16.mxu0 0
    %329 = vmatpush2.bf16.msra.mxu0 0
    %330 = vmatprep.subr.bf16.mxu0 0
    %331 = vmatpush2.bf16.msra.mxu0 0
    %332 = vmatprep.subr.bf16.mxu0 0
    %333 = vmatpush2.bf16.msra.mxu0 0
    %334 = vmatprep.mubr.bf16.mxu0 0
    %335 = vmatmul.mubr.bf16.gmra.mxu0 %v247
    %v336 = vpop.f32.mrf.mxu0
    %v337 = vadd.f32 %v252, %v336
    %v338 = vpop.f32.mrf.mxu0
    %v339 = vpop.f32.mrf.mxu0
    %v340 = vadd.f32 %v252, %v339
    %v341 = vpop.f32.mrf.mxu0
    %342 = vdwg.mxu0
    %vm343 = vcmask 392192
    %344 = vst.msk [vmem:[#allocation5] sm:$0xff] %vm343, %v337
    %345 = vst.msk [vmem:[#allocation5 + $0x8] sm:$0xff] %vm343, %v340
    // Predicated region
    $region34: #{tpu_custom_call.1} parent=1 // pred_check
      _
    $region35: #{tpu_custom_call.1} parent=1 // pred_check_branch
      %347 = sbr.rel (0) target = $region37
    $region36: #{tpu_custom_call.1} parent=1 // pred_region
      %s349 = ssub.s32 256, 256
      %350 = vsyncadd [#allocation4], %s349
      %s351 = sshll.u32 [#allocation5], 4
      %s352 = int_to_ptr.vmem [resolvable:$true] %s351
      %357 = dma.vmem_to_hbm [thread:$0]  %s352, 256, %s7, [#allocation4], 128, 128, 8
    $region37: #{tpu_custom_call.1} parent=1 // pred_fallthru
      _
    // Predicated region
    $region38: #{tpu_custom_call.1} parent=1 // pred_check
      _
    $region39: #{tpu_custom_call.1} parent=1 // pred_check_branch
      %359 = sbr.rel (0) target = $region41
    $region40: #{tpu_custom_call.1} parent=1 // pred_region
      %360 = dma.done [#allocation4], 256
    $region41: #{tpu_custom_call.1} parent=1 // pred_fallthru
      _
    %361 = vsyncpa [#allocation3], 1
    %362 = vsyncpa [#allocation4], 1

// kernel: tpu_custom_call.1
$region0: #{tpu_custom_call.1}
  #allocation0 [shape = 'u32[]', space=smem, size = 0x4, offset = 0x4, fixed_abs, tag = 'smem constant byte address 0x4 - core index']
  #allocation1 [shape = 'u32[144,128]{1,0:T(1,128)}', space=vmem, size = 0x12000, scoped, tag = 'internal scratch']
  %s0 = inlined_call_operand.vmem [shape: f32[16,32], index: 0, kind: input, shape index: {}]
  %s1 = inlined_call_operand.hbm [shape: bf16[32,128], index: 1, kind: input, shape index: {}]
  %s2 = inlined_call_operand.vmem [shape: f32[1,128], index: 2, kind: input, shape index: {}]
  %s3 = inlined_call_operand.vmem [shape: bf16[128,128], index: 3, kind: input, shape index: {}]
  %s4 = inlined_call_operand.vmem [shape: f32[1,128], index: 4, kind: input, shape index: {}]
  %s5 = inlined_call_operand.vmem [shape: bf16[128,48], index: 5, kind: input, shape index: {}]
  %s6 = inlined_call_operand.vmem [shape: f32[1,48], index: 6, kind: input, shape index: {}]
  %s7 = inlined_call_operand.hbm [shape: f32[16,48], index: 7, kind: output, shape index: {}]
  %s8 = sld [smem:[#allocation0]]
  $region42: #{tpu_custom_call.1} parent=0
    _
  %s10 = ssub.s32 1, %s8
  %s11 = scalar_select 0, %s10, %s8
  $region1: #{tpu_custom_call.1} parent=0
    #allocation2 [shape = 'u8[8192]{0}', space=vmem, size = 0x2000, scoped, tag = 'input window, operand 1, single buffered']
    #allocation3 [shape = 's32[1]{0}', space=sflag, size = 0x4, scoped, tag = 'scoped memory for tpu_custom_call.1']
    #allocation4 [shape = 's32[1]{0}', space=sflag, size = 0x4, scoped, tag = 'scoped memory for tpu_custom_call.1']
    #allocation5 [shape = 'u8[8192]{0}', space=vmem, size = 0x2000, scoped, tag = 'output window, operand 0, single buffered']
    %12 = vsyncpa [#allocation3], 0
    %13 = vsyncpa [#allocation4], 0
    // Predicated region
    $region2: #{tpu_custom_call.1} parent=1 // pred_check
      _
    $region3: #{tpu_custom_call.1} parent=1 // pred_check_branch
      %15 = sbr.rel (0) target = $region5
    $region4: #{tpu_custom_call.1} parent=1 // pred_region
      _
    $region5: #{tpu_custom_call.1} parent=1 // pred_fallthru
      _
    // Predicated region
    $region6: #{tpu_custom_call.1} parent=1 // pred_check
      _
    $region7: #{tpu_custom_call.1} parent=1 // pred_check_branch
      %17 = sbr.rel (0) target = $region9
    $region8: #{tpu_custom_call.1} parent=1 // pred_region
      %s19 = ssub.s32 256, 256
      %20 = vsyncadd [#allocation3], %s19
      %s21 = sshll.u32 [#allocation2], 4
      %s22 = int_to_ptr.vmem [resolvable:$true] %s21
      %27 = dma.hbm_to_vmem [thread:$0]  %s1, 256, %s22, [#allocation3], 64, 64, 4
    $region9: #{tpu_custom_call.1} parent=1 // pred_fallthru
      _
    // Predicated region
    $region10: #{tpu_custom_call.1} parent=1 // pred_check
      _
    $region11: #{tpu_custom_call.1} parent=1 // pred_check_branch
      %29 = sbr.rel (0) target = $region13
    $region12: #{tpu_custom_call.1} parent=1 // pred_region
      _
    $region13: #{tpu_custom_call.1} parent=1 // pred_fallthru
      _
    // Predicated region
    $region14: #{tpu_custom_call.1} parent=1 // pred_check
      _
    $region15: #{tpu_custom_call.1} parent=1 // pred_check_branch
      %31 = sbr.rel (0) target = $region17
    $region16: #{tpu_custom_call.1} parent=1 // pred_region
      _
    $region17: #{tpu_custom_call.1} parent=1 // pred_fallthru
      _
    // Predicated region
    $region18: #{tpu_custom_call.1} parent=1 // pred_check
      _
    $region19: #{tpu_custom_call.1} parent=1 // pred_check_branch
      %33 = sbr.rel (0) target = $region21
    $region20: #{tpu_custom_call.1} parent=1 // pred_region
      _
    $region21: #{tpu_custom_call.1} parent=1 // pred_fallthru
      _
    // Predicated region
    $region22: #{tpu_custom_call.1} parent=1 // pred_check
      _
    $region23: #{tpu_custom_call.1} parent=1 // pred_check_branch
      %35 = sbr.rel (0) target = $region25
    $region24: #{tpu_custom_call.1} parent=1 // pred_region
      _
    $region25: #{tpu_custom_call.1} parent=1 // pred_fallthru
      _
    // Predicated region
    $region26: #{tpu_custom_call.1} parent=1 // pred_check
      _
    $region27: #{tpu_custom_call.1} parent=1 // pred_check_branch
      %37 = sbr.rel (0) target = $region29
    $region28: #{tpu_custom_call.1} parent=1 // pred_region
      _
    $region29: #{tpu_custom_call.1} parent=1 // pred_fallthru
      _
    // Predicated region
    $region30: #{tpu_custom_call.1} parent=1 // pred_check
      _
    $region31: #{tpu_custom_call.1} parent=1 // pred_check_branch
      %39 = sbr.rel (0) target = $region33
    $region32: #{tpu_custom_call.1} parent=1 // pred_region
      %40 = dma.done [#allocation3], 256
    $region33: #{tpu_custom_call.1} parent=1 // pred_fallthru
      _
    %v42 = vld [vmem:[%s0] sm:$0xff]
    %v43 = vld [vmem:[%s0 + $0x8] sm:$0xff]
    %v44 = vld [vmem:[#allocation2] sm:$0xf]
    %v45 = vld [vmem:[#allocation2 + $0x4] sm:$0xf]
    %v46 = vld [vmem:[#allocation2 + $0x8] sm:$0xf]
    %v47 = vld [vmem:[#allocation2 + $0xc] sm:$0xf]
    %v48 = vld [vmem:[%s2] sm:$0x1]
    %v49 = vpack.c.bf16 %v43, %v42
    %v51 = vlaneseq
    %v52 = vshrl.u32 %v51, 7
    %v53 = vsub.s32 0, %v52
    %v54 = vrot.slane %v48, %v53
    %v60 = vunpack.c.l.b16 %v44
    %v61 = vunpack.c.l.b16 %v45
    %v62 = vunpack.c.l.b16 %v46
    %v63 = vunpack.c.l.b16 %v47
    %v64 = vpack.c.b16 %v61, %v60
    %v65 = vpack.c.b16 %v63, %v62
    %vm68 = vcmask 261120
    %v70 = vsel %vm68, %v49, 0
    %72 = vmatprep.subr.bf16.mxu0 0
    %73 = vmatpush1.bf16.msra.mxu0 0
    %74 = vmatprep.subr.bf16.mxu0 0
    %75 = vmatpush1.bf16.msra.mxu0 0
    %76 = vmatprep.subr.bf16.mxu0 0
    %77 = vmatpush1.bf16.msra.mxu0 0
    %78 = vmatprep.subr.bf16.mxu0 0
    %79 = vmatpush1.bf16.msra.mxu0 0
    %80 = vmatprep.subr.bf16.mxu0 0
    %81 = vmatpush1.bf16.msra.mxu0 0
    %82 = vmatprep.subr.bf16.mxu0 0
    %83 = vmatpush1.bf16.msra.mxu0 0
    %84 = vmatprep.subr.bf16.mxu0 0
    %85 = vmatpush1.bf16.msra.mxu0 %v65
    %86 = vmatprep.subr.bf16.mxu0 0
    %87 = vmatpush1.bf16.msra.mxu0 %v64
    %88 = vmatprep.subr.bf16.mxu0 0
    %89 = vmatpush2.bf16.msra.mxu0 0
    %90 = vmatprep.subr.bf16.mxu0 0
    %91 = vmatpush2.bf16.msra.mxu0 0
    %92 = vmatprep.subr.bf16.mxu0 0
    %93 = vmatpush2.bf16.msra.mxu0 0
    %94 = vmatprep.subr.bf16.mxu0 0
    %95 = vmatpush2.bf16.msra.mxu0 0
    %96 = vmatprep.subr.bf16.mxu0 0
    %97 = vmatpush2.bf16.msra.mxu0 0
    %98 = vmatprep.subr.bf16.mxu0 0
    %99 = vmatpush2.bf16.msra.mxu0 0
    %100 = vmatprep.subr.bf16.mxu0 0
    %101 = vmatpush2.bf16.msra.mxu0 0
    %102 = vmatprep.subr.bf16.mxu0 0
    %103 = vmatpush2.bf16.msra.mxu0 0
    %104 = vmatprep.mubr.bf16.mxu0 0
    %105 = vmatmul.mubr.bf16.gmra.mxu0 %v70
    %v106 = vpop.f32.mrf.mxu0
    %v107 = vadd.f32 %v54, %v106
    %v108 = vpop.f32.mrf.mxu0
    %v109 = vpop.f32.mrf.mxu0
    %v110 = vadd.f32 %v54, %v109
    %v111 = vpop.f32.mrf.mxu0
    %112 = vdwg.mxu0
    %v113 = vmax.f32 %v107, 0.0
    %v114 = vmax.f32 %v110, 0.0
    %v115 = vld [vmem:[%s3] sm:$0xf]
    %v116 = vld [vmem:[%s3 + $0x4] sm:$0xf]
    %v117 = vld [vmem:[%s3 + $0x8] sm:$0xf]
    %v118 = vld [vmem:[%s3 + $0xc] sm:$0xf]
    %v119 = vld [vmem:[%s3 + $0x10] sm:$0xf]
    %v120 = vld [vmem:[%s3 + $0x14] sm:$0xf]
    %v121 = vld [vmem:[%s3 + $0x18] sm:$0xf]
    %v122 = vld [vmem:[%s3 + $0x1c] sm:$0xf]
    %v123 = vld [vmem:[%s3 + $0x20] sm:$0xf]
    %v124 = vld [vmem:[%s3 + $0x24] sm:$0xf]
    %v125 = vld [vmem:[%s3 + $0x28] sm:$0xf]
    %v126 = vld [vmem:[%s3 + $0x2c] sm:$0xf]
    %v127 = vld [vmem:[%s3 + $0x30] sm:$0xf]
    %v128 = vld [vmem:[%s3 + $0x34] sm:$0xf]
    %v129 = vld [vmem:[%s3 + $0x38] sm:$0xf]
    %v130 = vld [vmem:[%s3 + $0x3c] sm:$0xf]
    %v131 = vld [vmem:[%s4] sm:$0x1]
    %v132 = vpack.c.bf16 %v114, %v113
    %v134 = vlaneseq
    %v135 = vshrl.u32 %v134, 7
    %v136 = vsub.s32 0, %v135
    %v137 = vrot.slane %v131, %v136
    %v155 = vunpack.c.l.b16 %v115
    %v156 = vunpack.c.l.b16 %v116
    %v157 = vunpack.c.l.b16 %v117
    %v158 = vunpack.c.l.b16 %v118
    %v159 = vunpack.c.l.b16 %v119
    %v160 = vunpack.c.l.b16 %v120
    %v161 = vunpack.c.l.b16 %v121
    %v162 = vunpack.c.l.b16 %v122
    %v163 = vunpack.c.l.b16 %v123
    %v164 = vunpack.c.l.b16 %v124
    %v165 = vunpack.c.l.b16 %v125
    %v166 = vunpack.c.l.b16 %v126
    %v167 = vunpack.c.l.b16 %v127
    %v168 = vunpack.c.l.b16 %v128
    %v169 = vunpack.c.l.b16 %v129
    %v170 = vunpack.c.l.b16 %v130
    %v171 = vpack.c.b16 %v156, %v155
    %v172 = vpack.c.b16 %v158, %v157
    %v173 = vpack.c.b16 %v160, %v159
    %v174 = vpack.c.b16 %v162, %v161
    %v175 = vpack.c.b16 %v164, %v163
    %v176 = vpack.c.b16 %v166, %v165
    %v177 = vpack.c.b16 %v168, %v167
    %v178 = vpack.c.b16 %v170, %v169
    %187 = vmatprep.subr.bf16.mxu0 0
    %188 = vmatpush1.bf16.msra.mxu0 %v178
    %189 = vmatprep.subr.bf16.mxu0 0
    %190 = vmatpush1.bf16.msra.mxu0 %v177
    %191 = vmatprep.subr.bf16.mxu0 0
    %192 = vmatpush1.bf16.msra.mxu0 %v176
    %193 = vmatprep.subr.bf16.mxu0 0
    %194 = vmatpush1.bf16.msra.mxu0 %v175
    %195 = vmatprep.subr.bf16.mxu0 0
    %196 = vmatpush1.bf16.msra.mxu0 %v174
    %197 = vmatprep.subr.bf16.mxu0 0
    %198 = vmatpush1.bf16.msra.mxu0 %v173
    %199 = vmatprep.subr.bf16.mxu0 0
    %200 = vmatpush1.bf16.msra.mxu0 %v172
    %201 = vmatprep.subr.bf16.mxu0 0
    %202 = vmatpush1.bf16.msra.mxu0 %v171
    %203 = vmatprep.subr.bf16.mxu0 0
    %204 = vmatpush2.bf16.msra.mxu0 0
    %205 = vmatprep.subr.bf16.mxu0 0
    %206 = vmatpush2.bf16.msra.mxu0 0
    %207 = vmatprep.subr.bf16.mxu0 0
    %208 = vmatpush2.bf16.msra.mxu0 0
    %209 = vmatprep.subr.bf16.mxu0 0
    %210 = vmatpush2.bf16.msra.mxu0 0
    %211 = vmatprep.subr.bf16.mxu0 0
    %212 = vmatpush2.bf16.msra.mxu0 0
    %213 = vmatprep.subr.bf16.mxu0 0
    %214 = vmatpush2.bf16.msra.mxu0 0
    %215 = vmatprep.subr.bf16.mxu0 0
    %216 = vmatpush2.bf16.msra.mxu0 0
    %217 = vmatprep.subr.bf16.mxu0 0
    %218 = vmatpush2.bf16.msra.mxu0 0
    %219 = vmatprep.mubr.bf16.mxu0 0
    %220 = vmatmul.mubr.bf16.gmra.mxu0 %v132
    %v221 = vpop.f32.mrf.mxu0
    %v222 = vadd.f32 %v137, %v221
    %v223 = vpop.f32.mrf.mxu0
    %v224 = vpop.f32.mrf.mxu0
    %v225 = vadd.f32 %v137, %v224
    %v226 = vpop.f32.mrf.mxu0
    %227 = vdwg.mxu0
    %v228 = vmax.f32 %v222, 0.0
    %v229 = vmax.f32 %v225, 0.0
    %v230 = vld [vmem:[%s5] sm:$0xf]
    %v231 = vld [vmem:[%s5 + $0x4] sm:$0xf]
    %v232 = vld [vmem:[%s5 + $0x8] sm:$0xf]
    %v233 = vld [vmem:[%s5 + $0xc] sm:$0xf]
    %v234 = vld [vmem:[%s5 + $0x10] sm:$0xf]
    %v235 = vld [vmem:[%s5 + $0x14] sm:$0xf]
    %v236 = vld [vmem:[%s5 + $0x18] sm:$0xf]
    %v237 = vld [vmem:[%s5 + $0x1c] sm:$0xf]
    %v238 = vld [vmem:[%s5 + $0x20] sm:$0xf]
    %v239 = vld [vmem:[%s5 + $0x24] sm:$0xf]
    %v240 = vld [vmem:[%s5 + $0x28] sm:$0xf]
    %v241 = vld [vmem:[%s5 + $0x2c] sm:$0xf]
    %v242 = vld [vmem:[%s5 + $0x30] sm:$0xf]
    %v243 = vld [vmem:[%s5 + $0x34] sm:$0xf]
    %v244 = vld [vmem:[%s5 + $0x38] sm:$0xf]
    %v245 = vld [vmem:[%s5 + $0x3c] sm:$0xf]
    %v246 = vld [vmem:[%s6] sm:$0x1]
    %v247 = vpack.c.bf16 %v229, %v228
    %v249 = vlaneseq
    %v250 = vshrl.u32 %v249, 7
    %v251 = vsub.s32 0, %v250
    %v252 = vrot.slane %v246, %v251
    %v270 = vunpack.c.l.b16 %v230
    %v271 = vunpack.c.l.b16 %v231
    %v272 = vunpack.c.l.b16 %v232
    %v273 = vunpack.c.l.b16 %v233
    %v274 = vunpack.c.l.b16 %v234
    %v275 = vunpack.c.l.b16 %v235
    %v276 = vunpack.c.l.b16 %v236
    %v277 = vunpack.c.l.b16 %v237
    %v278 = vunpack.c.l.b16 %v238
    %v279 = vunpack.c.l.b16 %v239
    %v280 = vunpack.c.l.b16 %v240
    %v281 = vunpack.c.l.b16 %v241
    %v282 = vunpack.c.l.b16 %v242
    %v283 = vunpack.c.l.b16 %v243
    %v284 = vunpack.c.l.b16 %v244
    %v285 = vunpack.c.l.b16 %v245
    %v286 = vpack.c.b16 %v271, %v270
    %v287 = vpack.c.b16 %v273, %v272
    %v288 = vpack.c.b16 %v275, %v274
    %v289 = vpack.c.b16 %v277, %v276
    %v290 = vpack.c.b16 %v279, %v278
    %v291 = vpack.c.b16 %v281, %v280
    %v292 = vpack.c.b16 %v283, %v282
    %v293 = vpack.c.b16 %v285, %v284
    %302 = vmatprep.subr.bf16.mxu0 0
    %303 = vmatpush1.bf16.msra.mxu0 %v293
    %304 = vmatprep.subr.bf16.mxu0 0
    %305 = vmatpush1.bf16.msra.mxu0 %v292
    %306 = vmatprep.subr.bf16.mxu0 0
    %307 = vmatpush1.bf16.msra.mxu0 %v291
    %308 = vmatprep.subr.bf16.mxu0 0
    %309 = vmatpush1.bf16.msra.mxu0 %v290
    %310 = vmatprep.subr.bf16.mxu0 0
    %311 = vmatpush1.bf16.msra.mxu0 %v289
    %312 = vmatprep.subr.bf16.mxu0 0
    %313 = vmatpush1.bf16.msra.mxu0 %v288
    %314 = vmatprep.subr.bf16.mxu0 0
    %315 = vmatpush1.bf16.msra.mxu0 %v287
    %316 = vmatprep.subr.bf16.mxu0 0
    %317 = vmatpush1.bf16.msra.mxu0 %v286
    %318 = vmatprep.subr.bf16.mxu0 0
    %319 = vmatpush2.bf16.msra.mxu0 0
    %320 = vmatprep.subr.bf16.mxu0 0
    %321 = vmatpush2.bf16.msra.mxu0 0
    %322 = vmatprep.subr.bf16.mxu0 0
    %323 = vmatpush2.bf16.msra.mxu0 0
    %324 = vmatprep.subr.bf16.mxu0 0
    %325 = vmatpush2.bf16.msra.mxu0 0
    %326 = vmatprep.subr.bf16.mxu0 0
    %327 = vmatpush2.bf16.msra.mxu0 0
    %328 = vmatprep.subr.bf16.mxu0 0
    %329 = vmatpush2.bf16.msra.mxu0 0
    %330 = vmatprep.subr.bf16.mxu0 0
    %331 = vmatpush2.bf16.msra.mxu0 0
    %332 = vmatprep.subr.bf16.mxu0 0
    %333 = vmatpush2.bf16.msra.mxu0 0
    %334 = vmatprep.mubr.bf16.mxu0 0
    %335 = vmatmul.mubr.bf16.gmra.mxu0 %v247
    %v336 = vpop.f32.mrf.mxu0
    %v337 = vadd.f32 %v252, %v336
    %v338 = vpop.f32.mrf.mxu0
    %v339 = vpop.f32.mrf.mxu0
    %v340 = vadd.f32 %v252, %v339
    %v341 = vpop.f32.mrf.mxu0
    %342 = vdwg.mxu0
    %vm343 = vcmask 392192
    %344 = vst.msk [vmem:[#allocation5] sm:$0xff] %vm343, %v337
    %345 = vst.msk [vmem:[#allocation5 + $0x8] sm:$0xff] %vm343, %v340
    // Predicated region
    $region34: #{tpu_custom_call.1} parent=1 // pred_check
      _
    $region35: #{tpu_custom_call.1} parent=1 // pred_check_branch
      %347 = sbr.rel (0) target = $region37
    $region36: #{tpu_custom_call.1} parent=1 // pred_region
      %s349 = ssub.s32 256, 256
      %350 = vsyncadd [#allocation4], %s349
      %s351 = sshll.u32 [#allocation5], 4
      %s352 = int_to_ptr.vmem [resolvable:$true] %s351
      %357 = dma.vmem_to_hbm [thread:$0]  %s352, 256, %s7, [#allocation4], 128, 128, 8
    $region37: #{tpu_custom_call.1} parent=1 // pred_fallthru
      _
    // Predicated region
    $region38: #{tpu_custom_call.1} parent=1 // pred_check
      _
    $region39: #{tpu_custom_call.1} parent=1 // pred_check_branch
      %359 = sbr.rel (0) target = $region41
    $region40: #{tpu_custom_call.1} parent=1 // pred_region
      %360 = dma.done [#allocation4], 256
    $region41: #{tpu_custom_call.1} parent=1 // pred_fallthru
      _
    %361 = vsyncpa [#allocation3], 1
    %362 = vsyncpa [#allocation4], 1

</llo_original>
